<compile_context>
chip_gen: v6e
topology: v6e:2x2x1
jax: 0.10.0
libtpu: 0.0.40
codegen_flags: <defaults>
</compile_context>

<pallas_src>
import jax
import jax.numpy as jnp
from jax.experimental import pallas as pl
from jax.experimental.pallas import tpu as pltpu


def autoencoder_kernel(x_ref,
                       w1, b1, w2, b2, w34, b34, w5, b5, w6, b6,
                       o_ref):
    """Fused encoder+decoder forward for one batch tile (everything in VMEM)."""
    cdt = w1.dtype  # matmul operand dtype (bf16); accumulation stays f32

    def layer(h, w_ref, b_ref, relu):
        y = jnp.dot(h, w_ref[...], preferred_element_type=jnp.float32)
        y = y + b_ref[...]                 # bias / ReLU in f32
        if relu:
            y = jnp.maximum(y, 0.0)
        return y.astype(cdt)               # cast only at matmul boundaries

    h = x_ref[...].astype(cdt)             # bf16 cast inside the kernel (free)
    h = layer(h, w1, b1, relu=True)        # encoder L1 + ReLU
    h = layer(h, w2, b2, relu=True)        # encoder L2 + ReLU
    h = layer(h, w34, b34, relu=True)      # fused encoder L3 + decoder L1 (+ ReLU)
    h = layer(h, w5, b5, relu=True)        # decoder L2 + ReLU
    y = jnp.dot(h, w6[...], preferred_element_type=jnp.float32) + b6[...]
    o_ref[...] = y.astype(o_ref.dtype)


# --------------------------------------------------------------------------- #
# Parameter preparation (run ONCE, not per forward call)
# --------------------------------------------------------------------------- #
def prepare_params(params, compute_dtype=jnp.bfloat16):
    """Fuse enc-L3/dec-L1 and cast weights once.

    params: list of 6 (W, b) pairs, W shaped (in, out), b shaped (1, out),
    in the PyTorch module's encoder/decoder layer order.

    NOTE: the W3@W4 fusion is valid ONLY because the reference module has NO
    activation on the code layer (encoder output feeds decoder L1 directly).
    """
    (w1, b1), (w2, b2), (w3, b3), (w4, b4), (w5, b5), (w6, b6) = params
    f32 = jnp.float32
    w34 = jnp.dot(w3.astype(f32), w4.astype(f32))
    b34 = jnp.dot(b3.astype(f32), w4.astype(f32)) + b4.astype(f32)

    weights = [w.astype(compute_dtype) for w in (w1, w2, w34, w5, w6)]
    biases = [b.astype(f32) for b in (b1, b2, b34, b5, b6)]
    flat = []
    for w, b in zip(weights, biases):
        flat += [w, b]
    return tuple(flat)


# --------------------------------------------------------------------------- #
# Batch tiling heuristic
# --------------------------------------------------------------------------- #
def _round_up(n, m):
    return ((n + m - 1) // m) * m


def _choose_batch_tile(B):
    """MXU-push-bound kernel: big tiles amortize the ~0.35us/step overhead,
    but keep >=2 grid steps whenever B >= 32 so both v7x TensorCores get fed.
    Tiles are multiples of 16 rows (bf16 sublane packing)."""
    if B < 32:
        return B                      # single step over the (tiny) full batch
    Bp = _round_up(B, 16)
    for t in (4096, 2048, 1024, 512, 256, 128, 64, 32, 16):
        if 2 * t <= Bp:               # guarantees >=2 grid steps
            return t
    return 16


def autoencoder_forward(x, flat_params, *, batch_tile=None, out_dtype=jnp.float32):
    """Forward pass of the AutoEncoder. `flat_params` comes from prepare_params."""
    B, D_in = x.shape
    D_out = flat_params[8].shape[1]   # w6 is (h1, input_num)

    if batch_tile is None:
        batch_tile = _choose_batch_tile(B)

    # Pad the batch up to a multiple of batch_tile (zero rows, sliced off
    # afterwards) instead of falling back to one unpipelined whole-batch step.
    Bp = _round_up(B, batch_tile)
    if Bp != B:
        x = jnp.pad(x, ((0, Bp - B), (0, 0)))
    grid = (Bp // batch_tile,)

    # Weights/biases (~40 KB total) are constant across grid steps: keep the
    # whole arrays resident in VMEM, no blocking / double-buffering.
    const_spec = pl.BlockSpec(memory_space=pltpu.MemorySpace.VMEM)
    in_specs = [pl.BlockSpec((batch_tile, D_in), lambda i: (i, 0))]
    in_specs += [const_spec] * len(flat_params)

    out = pl.pallas_call(
        autoencoder_kernel,
        out_shape=jax.ShapeDtypeStruct((Bp, D_out), out_dtype),
        grid_spec=pltpu.PrefetchScalarGridSpec(
            num_scalar_prefetch=0,
            grid=grid,
            in_specs=in_specs,
            out_specs=pl.BlockSpec((batch_tile, D_out), lambda i: (i, 0)),
        ),
        compiler_params=pltpu.CompilerParams(
            dimension_semantics=("parallel",)),
    )(x, *flat_params)

    if Bp != B:
        out = out[:B]
    return out


# --------------------------------------------------------------------------- #
# Init + references (spec semantics)
# --------------------------------------------------------------------------- #
def init_linear(key, fan_in, fan_out, dtype=jnp.float32):
    """Deterministic init mimicking torch.nn.Linear (uniform +-1/sqrt(fan_in)).
    Weight stored as (in, out); bias as (1, out) for TPU-friendly broadcast."""
    kw, kb = jax.random.split(key)
    bound = 1.0 / (fan_in ** 0.5)
    w = jax.random.uniform(kw, (fan_in, fan_out), dtype, minval=-bound, maxval=bound)
    b = jax.random.uniform(kb, (1, fan_out), dtype, minval=-bound, maxval=bound)
    return w, b


def reference_forward_f32(x, params):
    """Pure-JAX f32 reference with the original 6-layer structure (the spec)."""
    (w1, b1), (w2, b2), (w3, b3), (w4, b4), (w5, b5), (w6, b6) = params
    h = jnp.maximum(x @ w1 + b1, 0.0)
    h = jnp.maximum(h @ w2 + b2, 0.0)
    code = h @ w3 + b3
    h = jnp.maximum(code @ w4 + b4, 0.0)
    h = jnp.maximum(h @ w5 + b5, 0.0)
    return h @ w6 + b6


def reference_forward_mixed(x, params, param_dtype=jnp.bfloat16):
    """Mirrors the kernel's precision policy (bf16 matmul operands, f32
    accumulation/bias/ReLU) but keeps the un-fused 6-layer structure, so it
    also validates the W3@W4 fusion."""
    def lin(h, w, b, relu):
        y = jnp.dot(h.astype(param_dtype), w.astype(param_dtype),
                    preferred_element_type=jnp.float32) + b.astype(jnp.float32)
        return jnp.maximum(y, 0.0) if relu else y

    (w1, b1), (w2, b2), (w3, b3), (w4, b4), (w5, b5), (w6, b6) = params
    h = lin(x, w1, b1, True)
    h = lin(h, w2, b2, True)
    code = lin(h, w3, b3, False)
    h = lin(code, w4, b4, True)
    h = lin(h, w5, b5, True)
    return lin(h, w6, b6, False)


if __name__ == "__main__":
    # cfg: input_num=128, num_ae_hidden1=64, num_ae_hidden2=32, num_ae_output=16
    input_num, h1, h2, code_dim = 128, 64, 32, 16
    batch = 64   # small demo batch -> 2 grid steps of 32 rows (feeds 2 v7x TCs)

    root = jax.random.PRNGKey(0)
    keys = jax.random.split(root, 7)

    # encoder: in->h1, h1->h2, h2->code ; decoder: code->h2, h2->h1, h1->in
    dims = [(input_num, h1), (h1, h2), (h2, code_dim),
            (code_dim, h2), (h2, h1), (h1, input_num)]
    params = [init_linear(k, fi, fo) for k, (fi, fo) in zip(keys[:6], dims)]
    flat_params = prepare_params(params)           # fuse + cast ONCE

    x = jax.random.normal(keys[6], (batch, input_num), jnp.float32)

    out = autoencoder_forward(x, flat_params)
    out = jax.block_until_ready(out)
    assert out.shape == (batch, input_num)
    assert out.dtype == jnp.float32

    # Tight check vs. a reference that mirrors the kernel's mixed precision
    # (validates the layer-3/4 fusion and the kernel itself).
    ref_mixed = reference_forward_mixed(x, params)
    assert jnp.allclose(out, ref_mixed, atol=2e-2, rtol=2e-2), \
        "mismatch vs mixed-precision reference"
    # Looser check vs. the full-f32 spec semantics (tolerance absorbs bf16 weights).
    ref_f32 = reference_forward_f32(x, params)
    assert jnp.allclose(out, ref_f32, atol=6e-2, rtol=6e-2), \
        "mismatch vs f32 reference"

    print("KERNEL_OK")
</pallas_src>

<mosaic_0001>
module attributes {stable_mosaic.version = 11 : i64} {
  func.func @autoencoder_kernel(%arg0: i32, %arg1: memref<32x128xf32, #tpu.memory_space<vmem>>, %arg2: memref<128x64xbf16, #tpu.memory_space<vmem>>, %arg3: memref<1x64xf32, #tpu.memory_space<vmem>>, %arg4: memref<64x32xbf16, #tpu.memory_space<vmem>>, %arg5: memref<1x32xf32, #tpu.memory_space<vmem>>, %arg6: memref<32x32xbf16, #tpu.memory_space<vmem>>, %arg7: memref<1x32xf32, #tpu.memory_space<vmem>>, %arg8: memref<32x64xbf16, #tpu.memory_space<vmem>>, %arg9: memref<1x64xf32, #tpu.memory_space<vmem>>, %arg10: memref<64x128xbf16, #tpu.memory_space<vmem>>, %arg11: memref<1x128xf32, #tpu.memory_space<vmem>>, %arg12: memref<32x128xf32, #tpu.memory_space<vmem>>) attributes {dimension_semantics = [#tpu.dimension_semantics<parallel>], iteration_bounds = array<i64: 2>, scalar_prefetch = 0 : i64, scratch_operands = 0 : i64, tpu.core_type = #tpu.core_type<tc>, window_params = [{transform_indices = @transform_0, window_bounds = array<i64: 32, 128>}, {pipeline_mode = #tpu.pipeline_mode<synchronous>, transform_indices = @transform_1, window_bounds = array<i64: 128, 64>}, {pipeline_mode = #tpu.pipeline_mode<synchronous>, transform_indices = @transform_2, window_bounds = array<i64: 1, 64>}, {pipeline_mode = #tpu.pipeline_mode<synchronous>, transform_indices = @transform_3, window_bounds = array<i64: 64, 32>}, {pipeline_mode = #tpu.pipeline_mode<synchronous>, transform_indices = @transform_4, window_bounds = array<i64: 1, 32>}, {pipeline_mode = #tpu.pipeline_mode<synchronous>, transform_indices = @transform_5, window_bounds = array<i64: 32, 32>}, {pipeline_mode = #tpu.pipeline_mode<synchronous>, transform_indices = @transform_6, window_bounds = array<i64: 1, 32>}, {pipeline_mode = #tpu.pipeline_mode<synchronous>, transform_indices = @transform_7, window_bounds = array<i64: 32, 64>}, {pipeline_mode = #tpu.pipeline_mode<synchronous>, transform_indices = @transform_8, window_bounds = array<i64: 1, 64>}, {pipeline_mode = #tpu.pipeline_mode<synchronous>, transform_indices = @transform_9, window_bounds = array<i64: 64, 128>}, {pipeline_mode = #tpu.pipeline_mode<synchronous>, transform_indices = @transform_10, window_bounds = array<i64: 1, 128>}, {transform_indices = @transform_11, window_bounds = array<i64: 32, 128>}]} {
    %c0 = arith.constant 0 : index
    %c0_0 = arith.constant 0 : index
    %0 = vector.load %arg1[%c0, %c0_0] : memref<32x128xf32, #tpu.memory_space<vmem>>, vector<32x128xf32>
    %1 = arith.truncf %0 : vector<32x128xf32> to vector<32x128xbf16>
    %c0_1 = arith.constant 0 : index
    %c0_2 = arith.constant 0 : index
    %2 = vector.load %arg2[%c0_1, %c0_2] : memref<128x64xbf16, #tpu.memory_space<vmem>>, vector<128x64xbf16>
    %cst = arith.constant dense<0.000000e+00> : vector<32x64xf32>
    %3 = tpu.matmul %1, %2, %cst {dimension_numbers = #tpu.dot_dimension_numbers<[1], [0], [0], [1], [0, 0, 1, 1], [], []>} : vector<32x128xbf16>, vector<128x64xbf16>, vector<32x64xf32> -> vector<32x64xf32>
    %c0_3 = arith.constant 0 : index
    %c0_4 = arith.constant 0 : index
    %4 = vector.load %arg3[%c0_3, %c0_4] : memref<1x64xf32, #tpu.memory_space<vmem>>, vector<1x64xf32>
    %5 = vector.broadcast %4 : vector<1x64xf32> to vector<32x64xf32>
    %6 = arith.addf %3, %5 : vector<32x64xf32>
    %cst_5 = arith.constant 0.000000e+00 : f32
    %7 = vector.broadcast %cst_5 : f32 to vector<32x64xf32>
    %8 = arith.maximumf %6, %7 : vector<32x64xf32>
    %9 = arith.truncf %8 : vector<32x64xf32> to vector<32x64xbf16>
    %c0_6 = arith.constant 0 : index
    %c0_7 = arith.constant 0 : index
    %10 = vector.load %arg4[%c0_6, %c0_7] : memref<64x32xbf16, #tpu.memory_space<vmem>>, vector<64x32xbf16>
    %cst_8 = arith.constant dense<0.000000e+00> : vector<32x32xf32>
    %11 = tpu.matmul %9, %10, %cst_8 {dimension_numbers = #tpu.dot_dimension_numbers<[1], [0], [0], [1], [0, 0, 1, 1], [], []>} : vector<32x64xbf16>, vector<64x32xbf16>, vector<32x32xf32> -> vector<32x32xf32>
    %c0_9 = arith.constant 0 : index
    %c0_10 = arith.constant 0 : index
    %12 = vector.load %arg5[%c0_9, %c0_10] : memref<1x32xf32, #tpu.memory_space<vmem>>, vector<1x32xf32>
    %13 = vector.broadcast %12 : vector<1x32xf32> to vector<32x32xf32>
    %14 = arith.addf %11, %13 : vector<32x32xf32>
    %cst_11 = arith.constant 0.000000e+00 : f32
    %15 = vector.broadcast %cst_11 : f32 to vector<32x32xf32>
    %16 = arith.maximumf %14, %15 : vector<32x32xf32>
    %17 = arith.truncf %16 : vector<32x32xf32> to vector<32x32xbf16>
    %c0_12 = arith.constant 0 : index
    %c0_13 = arith.constant 0 : index
    %18 = vector.load %arg6[%c0_12, %c0_13] : memref<32x32xbf16, #tpu.memory_space<vmem>>, vector<32x32xbf16>
    %cst_14 = arith.constant dense<0.000000e+00> : vector<32x32xf32>
    %19 = tpu.matmul %17, %18, %cst_14 {dimension_numbers = #tpu.dot_dimension_numbers<[1], [0], [0], [1], [0, 0, 1, 1], [], []>} : vector<32x32xbf16>, vector<32x32xbf16>, vector<32x32xf32> -> vector<32x32xf32>
    %c0_15 = arith.constant 0 : index
    %c0_16 = arith.constant 0 : index
    %20 = vector.load %arg7[%c0_15, %c0_16] : memref<1x32xf32, #tpu.memory_space<vmem>>, vector<1x32xf32>
    %21 = vector.broadcast %20 : vector<1x32xf32> to vector<32x32xf32>
    %22 = arith.addf %19, %21 : vector<32x32xf32>
    %cst_17 = arith.constant 0.000000e+00 : f32
    %23 = vector.broadcast %cst_17 : f32 to vector<32x32xf32>
    %24 = arith.maximumf %22, %23 : vector<32x32xf32>
    %25 = arith.truncf %24 : vector<32x32xf32> to vector<32x32xbf16>
    %c0_18 = arith.constant 0 : index
    %c0_19 = arith.constant 0 : index
    %26 = vector.load %arg8[%c0_18, %c0_19] : memref<32x64xbf16, #tpu.memory_space<vmem>>, vector<32x64xbf16>
    %cst_20 = arith.constant dense<0.000000e+00> : vector<32x64xf32>
    %27 = tpu.matmul %25, %26, %cst_20 {dimension_numbers = #tpu.dot_dimension_numbers<[1], [0], [0], [1], [0, 0, 1, 1], [], []>} : vector<32x32xbf16>, vector<32x64xbf16>, vector<32x64xf32> -> vector<32x64xf32>
    %c0_21 = arith.constant 0 : index
    %c0_22 = arith.constant 0 : index
    %28 = vector.load %arg9[%c0_21, %c0_22] : memref<1x64xf32, #tpu.memory_space<vmem>>, vector<1x64xf32>
    %29 = vector.broadcast %28 : vector<1x64xf32> to vector<32x64xf32>
    %30 = arith.addf %27, %29 : vector<32x64xf32>
    %cst_23 = arith.constant 0.000000e+00 : f32
    %31 = vector.broadcast %cst_23 : f32 to vector<32x64xf32>
    %32 = arith.maximumf %30, %31 : vector<32x64xf32>
    %33 = arith.truncf %32 : vector<32x64xf32> to vector<32x64xbf16>
    %c0_24 = arith.constant 0 : index
    %c0_25 = arith.constant 0 : index
    %34 = vector.load %arg10[%c0_24, %c0_25] : memref<64x128xbf16, #tpu.memory_space<vmem>>, vector<64x128xbf16>
    %cst_26 = arith.constant dense<0.000000e+00> : vector<32x128xf32>
    %35 = tpu.matmul %33, %34, %cst_26 {dimension_numbers = #tpu.dot_dimension_numbers<[1], [0], [0], [1], [0, 0, 1, 1], [], []>} : vector<32x64xbf16>, vector<64x128xbf16>, vector<32x128xf32> -> vector<32x128xf32>
    %c0_27 = arith.constant 0 : index
    %c0_28 = arith.constant 0 : index
    %36 = vector.load %arg11[%c0_27, %c0_28] : memref<1x128xf32, #tpu.memory_space<vmem>>, vector<1x128xf32>
    %37 = vector.broadcast %36 : vector<1x128xf32> to vector<32x128xf32>
    %38 = arith.addf %35, %37 : vector<32x128xf32>
    %c0_29 = arith.constant 0 : index
    %c0_30 = arith.constant 0 : index
    %39 = vector.load %arg12[%c0_29, %c0_30] : memref<32x128xf32, #tpu.memory_space<vmem>>, vector<32x128xf32>
    tpu.vector_store %arg12[%c0_29, %c0_30], %38 {strides = array<i32>} : memref<32x128xf32, #tpu.memory_space<vmem>>, vector<32x128xf32>,
    return
  }
  func.func @transform_0(%arg0: i32) -> (i32, i32) {
    %c0_i32 = arith.constant 0 : i32
    %c0_i32_0 = arith.constant 0 : i32
    return %arg0, %c0_i32 : i32, i32
  }
  func.func @transform_1(%arg0: i32) -> (i32, i32) {
    %c0_i32 = arith.constant 0 : i32
    %c0_i32_0 = arith.constant 0 : i32
    %c0_i32_1 = arith.constant 0 : i32
    return %c0_i32, %c0_i32_0 : i32, i32
  }
  func.func @transform_2(%arg0: i32) -> (i32, i32) {
    %c0_i32 = arith.constant 0 : i32
    %c0_i32_0 = arith.constant 0 : i32
    %c0_i32_1 = arith.constant 0 : i32
    return %c0_i32, %c0_i32_0 : i32, i32
  }
  func.func @transform_3(%arg0: i32) -> (i32, i32) {
    %c0_i32 = arith.constant 0 : i32
    %c0_i32_0 = arith.constant 0 : i32
    %c0_i32_1 = arith.constant 0 : i32
    return %c0_i32, %c0_i32_0 : i32, i32
  }
  func.func @transform_4(%arg0: i32) -> (i32, i32) {
    %c0_i32 = arith.constant 0 : i32
    %c0_i32_0 = arith.constant 0 : i32
    %c0_i32_1 = arith.constant 0 : i32
    return %c0_i32, %c0_i32_0 : i32, i32
  }
  func.func @transform_5(%arg0: i32) -> (i32, i32) {
    %c0_i32 = arith.constant 0 : i32
    %c0_i32_0 = arith.constant 0 : i32
    %c0_i32_1 = arith.constant 0 : i32
    return %c0_i32, %c0_i32_0 : i32, i32
  }
  func.func @transform_6(%arg0: i32) -> (i32, i32) {
    %c0_i32 = arith.constant 0 : i32
    %c0_i32_0 = arith.constant 0 : i32
    %c0_i32_1 = arith.constant 0 : i32
    return %c0_i32, %c0_i32_0 : i32, i32
  }
  func.func @transform_7(%arg0: i32) -> (i32, i32) {
    %c0_i32 = arith.constant 0 : i32
    %c0_i32_0 = arith.constant 0 : i32
    %c0_i32_1 = arith.constant 0 : i32
    return %c0_i32, %c0_i32_0 : i32, i32
  }
  func.func @transform_8(%arg0: i32) -> (i32, i32) {
    %c0_i32 = arith.constant 0 : i32
    %c0_i32_0 = arith.constant 0 : i32
    %c0_i32_1 = arith.constant 0 : i32
    return %c0_i32, %c0_i32_0 : i32, i32
  }
  func.func @transform_9(%arg0: i32) -> (i32, i32) {
    %c0_i32 = arith.constant 0 : i32
    %c0_i32_0 = arith.constant 0 : i32
    %c0_i32_1 = arith.constant 0 : i32
    return %c0_i32, %c0_i32_0 : i32, i32
  }
  func.func @transform_10(%arg0: i32) -> (i32, i32) {
    %c0_i32 = arith.constant 0 : i32
    %c0_i32_0 = arith.constant 0 : i32
    %c0_i32_1 = arith.constant 0 : i32
    return %c0_i32, %c0_i32_0 : i32, i32
  }
  func.func @transform_11(%arg0: i32) -> (i32, i32) {
    %c0_i32 = arith.constant 0 : i32
    %c0_i32_0 = arith.constant 0 : i32
    return %arg0, %c0_i32 : i32, i32
  }
}

</mosaic_0001>

<llo_original>
// kernel: tpu_custom_call.1
$region0: #{tpu_custom_call.1}
  #allocation0 [shape = 'u32[]', space=smem, size = 0x4, offset = 0x4, fixed_abs, tag = 'smem constant byte address 0x4 - core index']
  #allocation1 [shape = 'u32[144,128]{1,0:T(1,128)}', space=vmem, size = 0x12000, scoped, tag = 'internal scratch']
  %s0 = inlined_call_operand.vmem [shape: f32[64,128], index: 0, kind: input, shape index: {}]
  %s1 = inlined_call_operand.vmem [shape: bf16[128,64], index: 1, kind: input, shape index: {}]
  %s2 = inlined_call_operand.vmem [shape: f32[1,64], index: 2, kind: input, shape index: {}]
  %s3 = inlined_call_operand.vmem [shape: bf16[64,32], index: 3, kind: input, shape index: {}]
  %s4 = inlined_call_operand.vmem [shape: f32[1,32], index: 4, kind: input, shape index: {}]
  %s5 = inlined_call_operand.vmem [shape: bf16[32,32], index: 5, kind: input, shape index: {}]
  %s6 = inlined_call_operand.vmem [shape: f32[1,32], index: 6, kind: input, shape index: {}]
  %s7 = inlined_call_operand.hbm [shape: bf16[32,64], index: 7, kind: input, shape index: {}]
  %s8 = inlined_call_operand.vmem [shape: f32[1,64], index: 8, kind: input, shape index: {}]
  %s9 = inlined_call_operand.vmem [shape: bf16[64,128], index: 9, kind: input, shape index: {}]
  %s10 = inlined_call_operand.vmem [shape: f32[1,128], index: 10, kind: input, shape index: {}]
  %s11 = inlined_call_operand.hbm [shape: f32[64,128], index: 11, kind: output, shape index: {}]
  %s12 = sld [smem:[#allocation0]]
  $region81: #{tpu_custom_call.1} parent=0
    _
  %s14 = ssub.s32 1, %s12
  %s15 = scalar_select 0, %s14, %s12
  $region1: #{tpu_custom_call.1} parent=0
    #allocation2 [shape = 'u8[8192]{0}', space=vmem, size = 0x2000, scoped, tag = 'input window, operand 7, single buffered']
    #allocation3 [shape = 's32[2]{0}', space=sflag, size = 0x8, scoped, tag = 'scoped memory for tpu_custom_call.1']
    #allocation4 [shape = 's32[2]{0}', space=sflag, size = 0x8, scoped, tag = 'scoped memory for tpu_custom_call.1']
    #allocation5 [shape = 'u8[32768]{0}', space=vmem, size = 0x8000, scoped, tag = 'output window, operand 0']
    %16 = vsyncpa [#allocation3], 0
    %17 = vsyncpa [#allocation4], 0
    %s18 = scalar_lea.sflag [#allocation4], 1
    %19 = vsyncpa %s18, 0
    loop: start=0, step=1, limit=4
    $region2: #{tpu_custom_call.1} parent=1 // loop_pre_header
      _
    $region3: #{tpu_custom_call.1} parent=1 // loop_header
      %s21 = sphi 0, %s25
      %p22 = scmp.ge.s32.totalorder %s21, 4
      %s31 = sphi 0, %s33
      %s34 = sphi 0, %s31
      %s35 = sphi 0, %s34
      %s51 = sphi 0, %s35
      %s55 = sphi 0, %s55
      %s57 = sphi 0, %s55
      %s58 = sphi 0, %s57
      %s72 = sphi 0, %s58
      %s76 = sphi 0, %s76
      %s78 = sphi 0, %s76
      %s79 = sphi 0, %s78
      %s93 = sphi 0, %s79
      %s97 = sphi 0, %s97
      %s99 = sphi 0, %s97
      %s100 = sphi 0, %s99
      %s114 = sphi 0, %s100
      %s118 = sphi 0, %s118
      %s120 = sphi 0, %s118
      %s121 = sphi 0, %s120
      %s135 = sphi 0, %s121
      %s139 = sphi 0, %s139
      %s141 = sphi 0, %s139
      %s142 = sphi 0, %s141
      %s156 = sphi 0, %s142
      %s160 = sphi 0, %s160
      %s162 = sphi 0, %s160
      %s163 = sphi 0, %s162
      %s177 = sphi 0, %s163
      %s181 = sphi 0, %s181
      %s183 = sphi 0, %s181
      %s184 = sphi 0, %s183
      %s198 = sphi 0, %s184
      %s202 = sphi 0, %s202
      %s204 = sphi 0, %s202
      %s205 = sphi 0, %s204
      %s219 = sphi 0, %s205
      %s223 = sphi 0, %s223
      %s225 = sphi 0, %s223
      %s226 = sphi 0, %s225
      %s240 = sphi 0, %s226
      %s244 = sphi 0, %s244
      %s246 = sphi 0, %s244
      %s247 = sphi 0, %s246
      %s261 = sphi 0, %s247
      %s267 = sphi 0, %s269
      %s270 = sphi 0, %s267
      %s271 = sphi 0, %s270
      %s287 = sphi 0, %s271
    $region4: #{tpu_custom_call.1} parent=1 // loop_header_branch
      %24 = sbr.rel (%p22) target = $region8
    $region5: #{tpu_custom_call.1} parent=1 // loop_body
      %s26 = ssub.s32 %s21, 1
      %s27 = ssub.s32 %s21, 2
      %s28 = sadd.s32 %s21, 1
      %s29 = ssub.s32 %s21, %s28
      %p30 = scmp.eq.s32.totalorder %s29, 0
      %s32 = sadd.s32 %s31, 1
      %s33 = scalar_select %p30, %s31, %s32
      %p36 = pneg %p30
      %p37 = scmp.eq.s32.totalorder %s21, 1
      %p38 = por %p36, %p37
      %p39 = scmp.ne.s32.totalorder %s31, %s34
      %p40 = scmp.eq.s32.totalorder %s21, 0
      %p41 = por %p39, %p40
      %p42 = scmp.ne.s32.totalorder %s31, %s34
      %p43 = scmp.eq.s32.totalorder %s26, 1
      %p44 = por %p42, %p43
      %p45 = scmp.ne.s32.totalorder %s34, %s35
      %p46 = scmp.eq.s32.totalorder %s26, 0
      %p47 = por %p45, %p46
      %p48 = scmp.ne.s32.totalorder %s34, %s35
      %p49 = scmp.eq.s32.totalorder %s27, 1
      %p50 = por %p48, %p49
      %p52 = scmp.ne.s32.totalorder %s35, %s51
      %p53 = scmp.eq.s32.totalorder %s27, 0
      %p54 = por %p52, %p53
      %s56 = sadd.s32 %s55, 1
      %p59 = scmp.eq.s32.totalorder %s21, 1
      %p60 = scmp.ne.s32.totalorder %s55, %s57
      %p61 = scmp.eq.s32.totalorder %s21, 0
      %p62 = por %p60, %p61
      %p63 = scmp.ne.s32.totalorder %s55, %s57
      %p64 = scmp.eq.s32.totalorder %s26, 1
      %p65 = por %p63, %p64
      %p66 = scmp.ne.s32.totalorder %s57, %s58
      %p67 = scmp.eq.s32.totalorder %s26, 0
      %p68 = por %p66, %p67
      %p69 = scmp.ne.s32.totalorder %s57, %s58
      %p70 = scmp.eq.s32.totalorder %s27, 1
      %p71 = por %p69, %p70
      %p73 = scmp.ne.s32.totalorder %s58, %s72
      %p74 = scmp.eq.s32.totalorder %s27, 0
      %p75 = por %p73, %p74
      %s77 = sadd.s32 %s76, 1
      %p80 = scmp.eq.s32.totalorder %s21, 1
      %p81 = scmp.ne.s32.totalorder %s76, %s78
      %p82 = scmp.eq.s32.totalorder %s21, 0
      %p83 = por %p81, %p82
      %p84 = scmp.ne.s32.totalorder %s76, %s78
      %p85 = scmp.eq.s32.totalorder %s26, 1
      %p86 = por %p84, %p85
      %p87 = scmp.ne.s32.totalorder %s78, %s79
      %p88 = scmp.eq.s32.totalorder %s26, 0
      %p89 = por %p87, %p88
      %p90 = scmp.ne.s32.totalorder %s78, %s79
      %p91 = scmp.eq.s32.totalorder %s27, 1
      %p92 = por %p90, %p91
      %p94 = scmp.ne.s32.totalorder %s79, %s93
      %p95 = scmp.eq.s32.totalorder %s27, 0
      %p96 = por %p94, %p95
      %s98 = sadd.s32 %s97, 1
      %p101 = scmp.eq.s32.totalorder %s21, 1
      %p102 = scmp.ne.s32.totalorder %s97, %s99
      %p103 = scmp.eq.s32.totalorder %s21, 0
      %p104 = por %p102, %p103
      %p105 = scmp.ne.s32.totalorder %s97, %s99
      %p106 = scmp.eq.s32.totalorder %s26, 1
      %p107 = por %p105, %p106
      %p108 = scmp.ne.s32.totalorder %s99, %s100
      %p109 = scmp.eq.s32.totalorder %s26, 0
      %p110 = por %p108, %p109
      %p111 = scmp.ne.s32.totalorder %s99, %s100
      %p112 = scmp.eq.s32.totalorder %s27, 1
      %p113 = por %p111, %p112
      %p115 = scmp.ne.s32.totalorder %s100, %s114
      %p116 = scmp.eq.s32.totalorder %s27, 0
      %p117 = por %p115, %p116
      %s119 = sadd.s32 %s118, 1
      %p122 = scmp.eq.s32.totalorder %s21, 1
      %p123 = scmp.ne.s32.totalorder %s118, %s120
      %p124 = scmp.eq.s32.totalorder %s21, 0
      %p125 = por %p123, %p124
      %p126 = scmp.ne.s32.totalorder %s118, %s120
      %p127 = scmp.eq.s32.totalorder %s26, 1
      %p128 = por %p126, %p127
      %p129 = scmp.ne.s32.totalorder %s120, %s121
      %p130 = scmp.eq.s32.totalorder %s26, 0
      %p131 = por %p129, %p130
      %p132 = scmp.ne.s32.totalorder %s120, %s121
      %p133 = scmp.eq.s32.totalorder %s27, 1
      %p134 = por %p132, %p133
      %p136 = scmp.ne.s32.totalorder %s121, %s135
      %p137 = scmp.eq.s32.totalorder %s27, 0
      %p138 = por %p136, %p137
      %s140 = sadd.s32 %s139, 1
      %p143 = scmp.eq.s32.totalorder %s21, 1
      %p144 = scmp.ne.s32.totalorder %s139, %s141
      %p145 = scmp.eq.s32.totalorder %s21, 0
      %p146 = por %p144, %p145
      %p147 = scmp.ne.s32.totalorder %s139, %s141
      %p148 = scmp.eq.s32.totalorder %s26, 1
      %p149 = por %p147, %p148
      %p150 = scmp.ne.s32.totalorder %s141, %s142
      %p151 = scmp.eq.s32.totalorder %s26, 0
      %p152 = por %p150, %p151
      %p153 = scmp.ne.s32.totalorder %s141, %s142
      %p154 = scmp.eq.s32.totalorder %s27, 1
      %p155 = por %p153, %p154
      %p157 = scmp.ne.s32.totalorder %s142, %s156
      %p158 = scmp.eq.s32.totalorder %s27, 0
      %p159 = por %p157, %p158
      %s161 = sadd.s32 %s160, 1
      %p164 = scmp.eq.s32.totalorder %s21, 1
      %p165 = scmp.ne.s32.totalorder %s160, %s162
      %p166 = scmp.eq.s32.totalorder %s21, 0
      %p167 = por %p165, %p166
      %p168 = scmp.ne.s32.totalorder %s160, %s162
      %p169 = scmp.eq.s32.totalorder %s26, 1
      %p170 = por %p168, %p169
      %p171 = scmp.ne.s32.totalorder %s162, %s163
      %p172 = scmp.eq.s32.totalorder %s26, 0
      %p173 = por %p171, %p172
      %p174 = scmp.ne.s32.totalorder %s162, %s163
      %p175 = scmp.eq.s32.totalorder %s27, 1
      %p176 = por %p174, %p175
      %p178 = scmp.ne.s32.totalorder %s163, %s177
      %p179 = scmp.eq.s32.totalorder %s27, 0
      %p180 = por %p178, %p179
      %s182 = sadd.s32 %s181, 1
      %p185 = scmp.eq.s32.totalorder %s21, 1
      %p186 = scmp.ne.s32.totalorder %s181, %s183
      %p187 = scmp.eq.s32.totalorder %s21, 0
      %p188 = por %p186, %p187
      %p189 = scmp.ne.s32.totalorder %s181, %s183
      %p190 = scmp.eq.s32.totalorder %s26, 1
      %p191 = por %p189, %p190
      %p192 = scmp.ne.s32.totalorder %s183, %s184
      %p193 = scmp.eq.s32.totalorder %s26, 0
      %p194 = por %p192, %p193
      %p195 = scmp.ne.s32.totalorder %s183, %s184
      %p196 = scmp.eq.s32.totalorder %s27, 1
      %p197 = por %p195, %p196
      %p199 = scmp.ne.s32.totalorder %s184, %s198
      %p200 = scmp.eq.s32.totalorder %s27, 0
      %p201 = por %p199, %p200
      %s203 = sadd.s32 %s202, 1
      %p206 = scmp.eq.s32.totalorder %s21, 1
      %p207 = scmp.ne.s32.totalorder %s202, %s204
      %p208 = scmp.eq.s32.totalorder %s21, 0
      %p209 = por %p207, %p208
      %p210 = scmp.ne.s32.totalorder %s202, %s204
      %p211 = scmp.eq.s32.totalorder %s26, 1
      %p212 = por %p210, %p211
      %p213 = scmp.ne.s32.totalorder %s204, %s205
      %p214 = scmp.eq.s32.totalorder %s26, 0
      %p215 = por %p213, %p214
      %p216 = scmp.ne.s32.totalorder %s204, %s205
      %p217 = scmp.eq.s32.totalorder %s27, 1
      %p218 = por %p216, %p217
      %p220 = scmp.ne.s32.totalorder %s205, %s219
      %p221 = scmp.eq.s32.totalorder %s27, 0
      %p222 = por %p220, %p221
      %s224 = sadd.s32 %s223, 1
      %p227 = scmp.eq.s32.totalorder %s21, 1
      %p228 = scmp.ne.s32.totalorder %s223, %s225
      %p229 = scmp.eq.s32.totalorder %s21, 0
      %p230 = por %p228, %p229
      %p231 = scmp.ne.s32.totalorder %s223, %s225
      %p232 = scmp.eq.s32.totalorder %s26, 1
      %p233 = por %p231, %p232
      %p234 = scmp.ne.s32.totalorder %s225, %s226
      %p235 = scmp.eq.s32.totalorder %s26, 0
      %p236 = por %p234, %p235
      %p237 = scmp.ne.s32.totalorder %s225, %s226
      %p238 = scmp.eq.s32.totalorder %s27, 1
      %p239 = por %p237, %p238
      %p241 = scmp.ne.s32.totalorder %s226, %s240
      %p242 = scmp.eq.s32.totalorder %s27, 0
      %p243 = por %p241, %p242
      %s245 = sadd.s32 %s244, 1
      %p248 = scmp.eq.s32.totalorder %s21, 1
      %p249 = scmp.ne.s32.totalorder %s244, %s246
      %p250 = scmp.eq.s32.totalorder %s21, 0
      %p251 = por %p249, %p250
      %p252 = scmp.ne.s32.totalorder %s244, %s246
      %p253 = scmp.eq.s32.totalorder %s26, 1
      %p254 = por %p252, %p253
      %p255 = scmp.ne.s32.totalorder %s246, %s247
      %p256 = scmp.eq.s32.totalorder %s26, 0
      %p257 = por %p255, %p256
      %p258 = scmp.ne.s32.totalorder %s246, %s247
      %p259 = scmp.eq.s32.totalorder %s27, 1
      %p260 = por %p258, %p259
      %p262 = scmp.ne.s32.totalorder %s247, %s261
      %p263 = scmp.eq.s32.totalorder %s27, 0
      %p264 = por %p262, %p263
      %s265 = ssub.s32 %s21, %s28
      %p266 = scmp.eq.s32.totalorder %s265, 0
      %s268 = sadd.s32 %s267, 1
      %s269 = scalar_select %p266, %s267, %s268
      %p272 = pneg %p266
      %p273 = scmp.eq.s32.totalorder %s21, 1
      %p274 = por %p272, %p273
      %p275 = scmp.ne.s32.totalorder %s267, %s270
      %p276 = scmp.eq.s32.totalorder %s21, 0
      %p277 = por %p275, %p276
      %p278 = scmp.ne.s32.totalorder %s267, %s270
      %p279 = scmp.eq.s32.totalorder %s26, 1
      %p280 = por %p278, %p279
      %p281 = scmp.ne.s32.totalorder %s270, %s271
      %p282 = scmp.eq.s32.totalorder %s26, 0
      %p283 = por %p281, %p282
      %p284 = scmp.ne.s32.totalorder %s270, %s271
      %p285 = scmp.eq.s32.totalorder %s27, 1
      %p286 = por %p284, %p285
      %p288 = scmp.ne.s32.totalorder %s271, %s287
      %p289 = scmp.eq.s32.totalorder %s27, 0
      %p290 = por %p288, %p289
      %p291 = scmp.le.s32.totalorder 1, %s21
      %p292 = scmp.lt.s32.totalorder %s21, 3
      %p293 = pnand %p291, %p292
      %p294 = pneg %p293
      // Predicated region
      $region9: #{tpu_custom_call.1} parent=5 // pred_check
        _
      $region10: #{tpu_custom_call.1} parent=5 // pred_check_branch
        %296 = sbr.rel (%p293) target = $region12
      $region11: #{tpu_custom_call.1} parent=5 // pred_region
        %s297 = ssub.s32 %s21, 1
        // Predicated region
        $region13: #{tpu_custom_call.1} parent=11 // pred_check
          %p298 = pneg %p68
        $region14: #{tpu_custom_call.1} parent=11 // pred_check_branch
          %300 = sbr.rel (%p298) target = $region16
        $region15: #{tpu_custom_call.1} parent=11 // pred_region
          _
        $region16: #{tpu_custom_call.1} parent=11 // pred_fallthru
          _
        // Predicated region
        $region17: #{tpu_custom_call.1} parent=11 // pred_check
          %p301 = pneg %p89
        $region18: #{tpu_custom_call.1} parent=11 // pred_check_branch
          %303 = sbr.rel (%p301) target = $region20
        $region19: #{tpu_custom_call.1} parent=11 // pred_region
          _
        $region20: #{tpu_custom_call.1} parent=11 // pred_fallthru
          _
        // Predicated region
        $region21: #{tpu_custom_call.1} parent=11 // pred_check
          %p304 = pneg %p110
        $region22: #{tpu_custom_call.1} parent=11 // pred_check_branch
          %306 = sbr.rel (%p304) target = $region24
        $region23: #{tpu_custom_call.1} parent=11 // pred_region
          _
        $region24: #{tpu_custom_call.1} parent=11 // pred_fallthru
          _
        // Predicated region
        $region25: #{tpu_custom_call.1} parent=11 // pred_check
          %p307 = pneg %p131
        $region26: #{tpu_custom_call.1} parent=11 // pred_check_branch
          %309 = sbr.rel (%p307) target = $region28
        $region27: #{tpu_custom_call.1} parent=11 // pred_region
          _
        $region28: #{tpu_custom_call.1} parent=11 // pred_fallthru
          _
        // Predicated region
        $region29: #{tpu_custom_call.1} parent=11 // pred_check
          %p310 = pneg %p152
        $region30: #{tpu_custom_call.1} parent=11 // pred_check_branch
          %312 = sbr.rel (%p310) target = $region32
        $region31: #{tpu_custom_call.1} parent=11 // pred_region
          _
        $region32: #{tpu_custom_call.1} parent=11 // pred_fallthru
          _
        // Predicated region
        $region33: #{tpu_custom_call.1} parent=11 // pred_check
          %p313 = pneg %p173
        $region34: #{tpu_custom_call.1} parent=11 // pred_check_branch
          %315 = sbr.rel (%p313) target = $region36
        $region35: #{tpu_custom_call.1} parent=11 // pred_region
          _
        $region36: #{tpu_custom_call.1} parent=11 // pred_fallthru
          _
        // Predicated region
        $region37: #{tpu_custom_call.1} parent=11 // pred_check
          %p316 = pneg %p194
        $region38: #{tpu_custom_call.1} parent=11 // pred_check_branch
          %318 = sbr.rel (%p316) target = $region40
        $region39: #{tpu_custom_call.1} parent=11 // pred_region
          %s320 = ssub.s32 256, 256
          %321 = vsyncadd [#allocation3], %s320
          %s322 = sshll.u32 [#allocation2], 4
          %s323 = int_to_ptr.vmem [resolvable:$true] %s322
          %328 = dma.hbm_to_vmem [thread:$0]  %s7, 256, %s323, [#allocation3], 64, 64, 4
        $region40: #{tpu_custom_call.1} parent=11 // pred_fallthru
          _
        // Predicated region
        $region41: #{tpu_custom_call.1} parent=11 // pred_check
          %p329 = pneg %p215
        $region42: #{tpu_custom_call.1} parent=11 // pred_check_branch
          %331 = sbr.rel (%p329) target = $region44
        $region43: #{tpu_custom_call.1} parent=11 // pred_region
          _
        $region44: #{tpu_custom_call.1} parent=11 // pred_fallthru
          _
        // Predicated region
        $region45: #{tpu_custom_call.1} parent=11 // pred_check
          %p332 = pneg %p236
        $region46: #{tpu_custom_call.1} parent=11 // pred_check_branch
          %334 = sbr.rel (%p332) target = $region48
        $region47: #{tpu_custom_call.1} parent=11 // pred_region
          _
        $region48: #{tpu_custom_call.1} parent=11 // pred_fallthru
          _
        // Predicated region
        $region49: #{tpu_custom_call.1} parent=11 // pred_check
          %p335 = pneg %p257
        $region50: #{tpu_custom_call.1} parent=11 // pred_check_branch
          %337 = sbr.rel (%p335) target = $region52
        $region51: #{tpu_custom_call.1} parent=11 // pred_region
          _
        $region52: #{tpu_custom_call.1} parent=11 // pred_fallthru
          _
      $region12: #{tpu_custom_call.1} parent=5 // pred_fallthru
        _
      %p338 = scmp.lt.s32.totalorder %s21, 2
      // Predicated region
      $region53: #{tpu_custom_call.1} parent=5 // pred_check
        %p339 = pneg %p338
      $region54: #{tpu_custom_call.1} parent=5 // pred_check_branch
        %341 = sbr.rel (%p339) target = $region56
      $region55: #{tpu_custom_call.1} parent=5 // pred_region
        // Predicated region
        $region57: #{tpu_custom_call.1} parent=55 // pred_check
          %p342 = pneg %p41
        $region58: #{tpu_custom_call.1} parent=55 // pred_check_branch
          %344 = sbr.rel (%p342) target = $region60
        $region59: #{tpu_custom_call.1} parent=55 // pred_region
          %s345 = smul.u32 4, %s21
          %p346 = scmp.lt.s32.totalorder %s345, 7
          %s347 = scalar_select %p346, %s345, 7
          %s348 = smul.addr %s347, 8
          %s349 = scalar_lea.vmem %s0, %s348
          %s350 = smul.u32 4, %s21
        $region60: #{tpu_custom_call.1} parent=55 // pred_fallthru
          _
      $region56: #{tpu_custom_call.1} parent=5 // pred_fallthru
        _
      %p351 = scmp.le.s32.totalorder 1, %s21
      %p352 = scmp.lt.s32.totalorder %s21, 3
      %p353 = pnand %p351, %p352
      %p354 = pneg %p353
      // Predicated region
      $region61: #{tpu_custom_call.1} parent=5 // pred_check
        _
      $region62: #{tpu_custom_call.1} parent=5 // pred_check_branch
        %356 = sbr.rel (%p353) target = $region64
      $region63: #{tpu_custom_call.1} parent=5 // pred_region
        %s357 = ssub.s32 %s21, 1
        // Predicated region
        $region65: #{tpu_custom_call.1} parent=63 // pred_check
          %p358 = pneg %p194
        $region66: #{tpu_custom_call.1} parent=63 // pred_check_branch
          %360 = sbr.rel (%p358) target = $region68
        $region67: #{tpu_custom_call.1} parent=63 // pred_region
          %361 = dma.done [#allocation3], 256
        $region68: #{tpu_custom_call.1} parent=63 // pred_fallthru
          _
        %s362 = smul.u32 4, %s26
        %p363 = scmp.lt.s32.totalorder %s362, 7
        %s364 = scalar_select %p363, %s362, 7
        %s365 = smul.addr %s364, 8
        %s366 = scalar_lea.vmem %s0, %s365
        %p367 = pneg %p47
        %p368 = pneg %p44
        %p369 = pneg %p68
        %p370 = pneg %p65
        %p371 = pneg %p89
        %p372 = pneg %p86
        %p373 = pneg %p110
        %p374 = pneg %p107
        %p375 = pneg %p131
        %p376 = pneg %p128
        %p377 = pneg %p152
        %p378 = pneg %p149
        %p379 = pneg %p173
        %p380 = pneg %p170
        %p381 = pneg %p194
        %p382 = pneg %p191
        %p383 = pneg %p215
        %p384 = pneg %p212
        %p385 = pneg %p236
        %p386 = pneg %p233
        %p387 = pneg %p257
        %p388 = pneg %p254
        %p389 = pneg %p283
        %p390 = pneg %p280
        %s391 = sand.u32 %s270, 1
        %s392 = scalar_lea.sflag [#allocation4], %s391
        %s393 = sand.u32 %s270, 1
        %s394 = smul.addr %s393, 32
        %s395 = scalar_lea.vmem [#allocation5], %s394
        %s396 = smul.u32 4, %s26
        %p397 = scmp.lt.s32.totalorder %s396, 7
        %s398 = scalar_select %p397, %s396, 7
        %s399 = smul.addr %s398, 8
        %s400 = scalar_lea.vmem %s0, %s399
        %s401 = smul.u32 4, %s26
        %s402 = smul.u32 4, %s26
        %v404 = vld [vmem:[%s400] sm:$0xff]
        %v405 = vld [vmem:[%s400 + $0x8] sm:$0xff]
        %v406 = vld [vmem:[%s400 + $0x10] sm:$0xff]
        %v407 = vld [vmem:[%s400 + $0x18] sm:$0xff]
        %v408 = vpack.c.bf16 %v405, %v404
        %v409 = vpack.c.bf16 %v407, %v406
        %v410 = vld [vmem:[%s1] sm:$0xf]
        %v411 = vld [vmem:[%s1 + $0x4] sm:$0xf]
        %v412 = vld [vmem:[%s1 + $0x8] sm:$0xf]
        %v413 = vld [vmem:[%s1 + $0xc] sm:$0xf]
        %v414 = vld [vmem:[%s1 + $0x10] sm:$0xf]
        %v415 = vld [vmem:[%s1 + $0x14] sm:$0xf]
        %v416 = vld [vmem:[%s1 + $0x18] sm:$0xf]
        %v417 = vld [vmem:[%s1 + $0x1c] sm:$0xf]
        %v418 = vld [vmem:[%s1 + $0x20] sm:$0xf]
        %v419 = vld [vmem:[%s1 + $0x24] sm:$0xf]
        %v420 = vld [vmem:[%s1 + $0x28] sm:$0xf]
        %v421 = vld [vmem:[%s1 + $0x2c] sm:$0xf]
        %v422 = vld [vmem:[%s1 + $0x30] sm:$0xf]
        %v423 = vld [vmem:[%s1 + $0x34] sm:$0xf]
        %v424 = vld [vmem:[%s1 + $0x38] sm:$0xf]
        %v425 = vld [vmem:[%s1 + $0x3c] sm:$0xf]
        %v426 = vld [vmem:[%s2] sm:$0x1]
        %v428 = vlaneseq
        %v429 = vshrl.u32 %v428, 7
        %v430 = vsub.s32 0, %v429
        %v431 = vrot.slane %v426, %v430
        %v449 = vunpack.c.l.b16 %v410
        %v450 = vunpack.c.l.b16 %v411
        %v451 = vunpack.c.l.b16 %v412
        %v452 = vunpack.c.l.b16 %v413
        %v453 = vunpack.c.l.b16 %v414
        %v454 = vunpack.c.l.b16 %v415
        %v455 = vunpack.c.l.b16 %v416
        %v456 = vunpack.c.l.b16 %v417
        %v457 = vunpack.c.l.b16 %v418
        %v458 = vunpack.c.l.b16 %v419
        %v459 = vunpack.c.l.b16 %v420
        %v460 = vunpack.c.l.b16 %v421
        %v461 = vunpack.c.l.b16 %v422
        %v462 = vunpack.c.l.b16 %v423
        %v463 = vunpack.c.l.b16 %v424
        %v464 = vunpack.c.l.b16 %v425
        %v465 = vpack.c.b16 %v450, %v449
        %v466 = vpack.c.b16 %v452, %v451
        %v467 = vpack.c.b16 %v454, %v453
        %v468 = vpack.c.b16 %v456, %v455
        %v469 = vpack.c.b16 %v458, %v457
        %v470 = vpack.c.b16 %v460, %v459
        %v471 = vpack.c.b16 %v462, %v461
        %v472 = vpack.c.b16 %v464, %v463
        %481 = vmatprep.subr.bf16.mxu0 0
        %482 = vmatpush1.bf16.msra.mxu0 %v472
        %483 = vmatprep.subr.bf16.mxu0 0
        %484 = vmatpush1.bf16.msra.mxu0 %v471
        %485 = vmatprep.subr.bf16.mxu0 0
        %486 = vmatpush1.bf16.msra.mxu0 %v470
        %487 = vmatprep.subr.bf16.mxu0 0
        %488 = vmatpush1.bf16.msra.mxu0 %v469
        %489 = vmatprep.subr.bf16.mxu0 0
        %490 = vmatpush1.bf16.msra.mxu0 %v468
        %491 = vmatprep.subr.bf16.mxu0 0
        %492 = vmatpush1.bf16.msra.mxu0 %v467
        %493 = vmatprep.subr.bf16.mxu0 0
        %494 = vmatpush1.bf16.msra.mxu0 %v466
        %495 = vmatprep.subr.bf16.mxu0 0
        %496 = vmatpush1.bf16.msra.mxu0 %v465
        %497 = vmatprep.subr.bf16.mxu0 0
        %498 = vmatpush2.bf16.msra.mxu0 0
        %499 = vmatprep.subr.bf16.mxu0 0
        %500 = vmatpush2.bf16.msra.mxu0 0
        %501 = vmatprep.subr.bf16.mxu0 0
        %502 = vmatpush2.bf16.msra.mxu0 0
        %503 = vmatprep.subr.bf16.mxu0 0
        %504 = vmatpush2.bf16.msra.mxu0 0
        %505 = vmatprep.subr.bf16.mxu0 0
        %506 = vmatpush2.bf16.msra.mxu0 0
        %507 = vmatprep.subr.bf16.mxu0 0
        %508 = vmatpush2.bf16.msra.mxu0 0
        %509 = vmatprep.subr.bf16.mxu0 0
        %510 = vmatpush2.bf16.msra.mxu0 0
        %511 = vmatprep.subr.bf16.mxu0 0
        %512 = vmatpush2.bf16.msra.mxu0 0
        %513 = vmatprep.mubr.bf16.mxu0 0
        %514 = vmatmul.mubr.bf16.gmra.mxu0 %v408
        %v515 = vpop.f32.mrf.mxu0
        %v516 = vadd.f32 %v431, %v515
        %v517 = vpop.f32.mrf.mxu0
        %v518 = vpop.f32.mrf.mxu0
        %v519 = vadd.f32 %v431, %v518
        %v520 = vpop.f32.mrf.mxu0
        %521 = vmatprep.mubr.bf16.mxu0 0
        %522 = vmatmul.mubr.bf16.gmra.mxu0 %v409
        %v523 = vpop.f32.mrf.mxu0
        %v524 = vadd.f32 %v431, %v523
        %v525 = vpop.f32.mrf.mxu0
        %v526 = vpop.f32.mrf.mxu0
        %v527 = vadd.f32 %v431, %v526
        %v528 = vpop.f32.mrf.mxu0
        %529 = vdwg.mxu0
        %v530 = vmax.f32 %v516, 0.0
        %v531 = vmax.f32 %v519, 0.0
        %v532 = vmax.f32 %v524, 0.0
        %v533 = vmax.f32 %v527, 0.0
        %v534 = vpack.c.bf16 %v531, %v530
        %v535 = vpack.c.bf16 %v533, %v532
        %v536 = vld [vmem:[%s3] sm:$0xf]
        %v537 = vld [vmem:[%s3 + $0x4] sm:$0xf]
        %v538 = vld [vmem:[%s3 + $0x8] sm:$0xf]
        %v539 = vld [vmem:[%s3 + $0xc] sm:$0xf]
        %v540 = vld [vmem:[%s3 + $0x10] sm:$0xf]
        %v541 = vld [vmem:[%s3 + $0x14] sm:$0xf]
        %v542 = vld [vmem:[%s3 + $0x18] sm:$0xf]
        %v543 = vld [vmem:[%s3 + $0x1c] sm:$0xf]
        %v544 = vld [vmem:[%s4] sm:$0x1]
        %v546 = vlaneseq
        %v547 = vshrl.u32 %v546, 7
        %v548 = vsub.s32 0, %v547
        %v549 = vrot.slane %v544, %v548
        %v559 = vunpack.c.l.b16 %v536
        %v560 = vunpack.c.l.b16 %v537
        %v561 = vunpack.c.l.b16 %v538
        %v562 = vunpack.c.l.b16 %v539
        %v563 = vunpack.c.l.b16 %v540
        %v564 = vunpack.c.l.b16 %v541
        %v565 = vunpack.c.l.b16 %v542
        %v566 = vunpack.c.l.b16 %v543
        %v567 = vpack.c.b16 %v560, %v559
        %v568 = vpack.c.b16 %v562, %v561
        %v569 = vpack.c.b16 %v564, %v563
        %v570 = vpack.c.b16 %v566, %v565
        %vm575 = vcmask 523264
        %v577 = vsel %vm575, %v534, 0
        %v580 = vsel %vm575, %v535, 0
        %582 = vmatprep.subr.bf16.mxu0 0
        %583 = vmatpush1.bf16.msra.mxu0 0
        %584 = vmatprep.subr.bf16.mxu0 0
        %585 = vmatpush1.bf16.msra.mxu0 0
        %586 = vmatprep.subr.bf16.mxu0 0
        %587 = vmatpush1.bf16.msra.mxu0 0
        %588 = vmatprep.subr.bf16.mxu0 0
        %589 = vmatpush1.bf16.msra.mxu0 0
        %590 = vmatprep.subr.bf16.mxu0 0
        %591 = vmatpush1.bf16.msra.mxu0 %v570
        %592 = vmatprep.subr.bf16.mxu0 0
        %593 = vmatpush1.bf16.msra.mxu0 %v569
        %594 = vmatprep.subr.bf16.mxu0 0
        %595 = vmatpush1.bf16.msra.mxu0 %v568
        %596 = vmatprep.subr.bf16.mxu0 0
        %597 = vmatpush1.bf16.msra.mxu0 %v567
        %598 = vmatprep.subr.bf16.mxu0 0
        %599 = vmatpush2.bf16.msra.mxu0 0
        %600 = vmatprep.subr.bf16.mxu0 0
        %601 = vmatpush2.bf16.msra.mxu0 0
        %602 = vmatprep.subr.bf16.mxu0 0
        %603 = vmatpush2.bf16.msra.mxu0 0
        %604 = vmatprep.subr.bf16.mxu0 0
        %605 = vmatpush2.bf16.msra.mxu0 0
        %606 = vmatprep.subr.bf16.mxu0 0
        %607 = vmatpush2.bf16.msra.mxu0 0
        %608 = vmatprep.subr.bf16.mxu0 0
        %609 = vmatpush2.bf16.msra.mxu0 0
        %610 = vmatprep.subr.bf16.mxu0 0
        %611 = vmatpush2.bf16.msra.mxu0 0
        %612 = vmatprep.subr.bf16.mxu0 0
        %613 = vmatpush2.bf16.msra.mxu0 0
        %614 = vmatprep.mubr.bf16.mxu0 0
        %615 = vmatmul.mubr.bf16.gmra.mxu0 %v577
        %v616 = vpop.f32.mrf.mxu0
        %v617 = vadd.f32 %v549, %v616
        %v618 = vpop.f32.mrf.mxu0
        %v619 = vpop.f32.mrf.mxu0
        %v620 = vadd.f32 %v549, %v619
        %v621 = vpop.f32.mrf.mxu0
        %622 = vmatprep.mubr.bf16.mxu0 0
        %623 = vmatmul.mubr.bf16.gmra.mxu0 %v580
        %v624 = vpop.f32.mrf.mxu0
        %v625 = vadd.f32 %v549, %v624
        %v626 = vpop.f32.mrf.mxu0
        %v627 = vpop.f32.mrf.mxu0
        %v628 = vadd.f32 %v549, %v627
        %v629 = vpop.f32.mrf.mxu0
        %630 = vdwg.mxu0
        %v631 = vmax.f32 %v617, 0.0
        %v632 = vmax.f32 %v620, 0.0
        %v633 = vmax.f32 %v625, 0.0
        %v634 = vmax.f32 %v628, 0.0
        %v635 = vpack.c.bf16 %v632, %v631
        %v636 = vpack.c.bf16 %v634, %v633
        %v637 = vld [vmem:[%s5] sm:$0xf]
        %v638 = vld [vmem:[%s5 + $0x4] sm:$0xf]
        %v639 = vld [vmem:[%s5 + $0x8] sm:$0xf]
        %v640 = vld [vmem:[%s5 + $0xc] sm:$0xf]
        %v641 = vld [vmem:[%s6] sm:$0x1]
        %v643 = vlaneseq
        %v644 = vshrl.u32 %v643, 7
        %v645 = vsub.s32 0, %v644
        %v646 = vrot.slane %v641, %v645
        %v652 = vunpack.c.l.b16 %v637
        %v653 = vunpack.c.l.b16 %v638
        %v654 = vunpack.c.l.b16 %v639
        %v655 = vunpack.c.l.b16 %v640
        %v656 = vpack.c.b16 %v653, %v652
        %v657 = vpack.c.b16 %v655, %v654
        %vm660 = vcmask 261120
        %v662 = vsel %vm660, %v635, 0
        %v665 = vsel %vm660, %v636, 0
        %667 = vmatprep.subr.bf16.mxu0 0
        %668 = vmatpush1.bf16.msra.mxu0 0
        %669 = vmatprep.subr.bf16.mxu0 0
        %670 = vmatpush1.bf16.msra.mxu0 0
        %671 = vmatprep.subr.bf16.mxu0 0
        %672 = vmatpush1.bf16.msra.mxu0 0
        %673 = vmatprep.subr.bf16.mxu0 0
        %674 = vmatpush1.bf16.msra.mxu0 0
        %675 = vmatprep.subr.bf16.mxu0 0
        %676 = vmatpush1.bf16.msra.mxu0 0
        %677 = vmatprep.subr.bf16.mxu0 0
        %678 = vmatpush1.bf16.msra.mxu0 0
        %679 = vmatprep.subr.bf16.mxu0 0
        %680 = vmatpush1.bf16.msra.mxu0 %v657
        %681 = vmatprep.subr.bf16.mxu0 0
        %682 = vmatpush1.bf16.msra.mxu0 %v656
        %683 = vmatprep.subr.bf16.mxu0 0
        %684 = vmatpush2.bf16.msra.mxu0 0
        %685 = vmatprep.subr.bf16.mxu0 0
        %686 = vmatpush2.bf16.msra.mxu0 0
        %687 = vmatprep.subr.bf16.mxu0 0
        %688 = vmatpush2.bf16.msra.mxu0 0
        %689 = vmatprep.subr.bf16.mxu0 0
        %690 = vmatpush2.bf16.msra.mxu0 0
        %691 = vmatprep.subr.bf16.mxu0 0
        %692 = vmatpush2.bf16.msra.mxu0 0
        %693 = vmatprep.subr.bf16.mxu0 0
        %694 = vmatpush2.bf16.msra.mxu0 0
        %695 = vmatprep.subr.bf16.mxu0 0
        %696 = vmatpush2.bf16.msra.mxu0 0
        %697 = vmatprep.subr.bf16.mxu0 0
        %698 = vmatpush2.bf16.msra.mxu0 0
        %699 = vmatprep.mubr.bf16.mxu0 0
        %700 = vmatmul.mubr.bf16.gmra.mxu0 %v662
        %v701 = vpop.f32.mrf.mxu0
        %v702 = vadd.f32 %v646, %v701
        %v703 = vpop.f32.mrf.mxu0
        %v704 = vpop.f32.mrf.mxu0
        %v705 = vadd.f32 %v646, %v704
        %v706 = vpop.f32.mrf.mxu0
        %707 = vmatprep.mubr.bf16.mxu0 0
        %708 = vmatmul.mubr.bf16.gmra.mxu0 %v665
        %v709 = vpop.f32.mrf.mxu0
        %v710 = vadd.f32 %v646, %v709
        %v711 = vpop.f32.mrf.mxu0
        %v712 = vpop.f32.mrf.mxu0
        %v713 = vadd.f32 %v646, %v712
        %v714 = vpop.f32.mrf.mxu0
        %715 = vdwg.mxu0
        %v716 = vmax.f32 %v702, 0.0
        %v717 = vmax.f32 %v705, 0.0
        %v718 = vmax.f32 %v710, 0.0
        %v719 = vmax.f32 %v713, 0.0
        %v720 = vpack.c.bf16 %v717, %v716
        %v721 = vpack.c.bf16 %v719, %v718
        %v722 = vld [vmem:[#allocation2] sm:$0xf]
        %v723 = vld [vmem:[#allocation2 + $0x4] sm:$0xf]
        %v724 = vld [vmem:[#allocation2 + $0x8] sm:$0xf]
        %v725 = vld [vmem:[#allocation2 + $0xc] sm:$0xf]
        %v726 = vld [vmem:[%s8] sm:$0x1]
        %v728 = vlaneseq
        %v729 = vshrl.u32 %v728, 7
        %v730 = vsub.s32 0, %v729
        %v731 = vrot.slane %v726, %v730
        %v737 = vunpack.c.l.b16 %v722
        %v738 = vunpack.c.l.b16 %v723
        %v739 = vunpack.c.l.b16 %v724
        %v740 = vunpack.c.l.b16 %v725
        %v741 = vpack.c.b16 %v738, %v737
        %v742 = vpack.c.b16 %v740, %v739
        %v746 = vsel %vm660, %v720, 0
        %v749 = vsel %vm660, %v721, 0
        %751 = vmatprep.subr.bf16.mxu0 0
        %752 = vmatpush1.bf16.msra.mxu0 0
        %753 = vmatprep.subr.bf16.mxu0 0
        %754 = vmatpush1.bf16.msra.mxu0 0
        %755 = vmatprep.subr.bf16.mxu0 0
        %756 = vmatpush1.bf16.msra.mxu0 0
        %757 = vmatprep.subr.bf16.mxu0 0
        %758 = vmatpush1.bf16.msra.mxu0 0
        %759 = vmatprep.subr.bf16.mxu0 0
        %760 = vmatpush1.bf16.msra.mxu0 0
        %761 = vmatprep.subr.bf16.mxu0 0
        %762 = vmatpush1.bf16.msra.mxu0 0
        %763 = vmatprep.subr.bf16.mxu0 0
        %764 = vmatpush1.bf16.msra.mxu0 %v742
        %765 = vmatprep.subr.bf16.mxu0 0
        %766 = vmatpush1.bf16.msra.mxu0 %v741
        %767 = vmatprep.subr.bf16.mxu0 0
        %768 = vmatpush2.bf16.msra.mxu0 0
        %769 = vmatprep.subr.bf16.mxu0 0
        %770 = vmatpush2.bf16.msra.mxu0 0
        %771 = vmatprep.subr.bf16.mxu0 0
        %772 = vmatpush2.bf16.msra.mxu0 0
        %773 = vmatprep.subr.bf16.mxu0 0
        %774 = vmatpush2.bf16.msra.mxu0 0
        %775 = vmatprep.subr.bf16.mxu0 0
        %776 = vmatpush2.bf16.msra.mxu0 0
        %777 = vmatprep.subr.bf16.mxu0 0
        %778 = vmatpush2.bf16.msra.mxu0 0
        %779 = vmatprep.subr.bf16.mxu0 0
        %780 = vmatpush2.bf16.msra.mxu0 0
        %781 = vmatprep.subr.bf16.mxu0 0
        %782 = vmatpush2.bf16.msra.mxu0 0
        %783 = vmatprep.mubr.bf16.mxu0 0
        %784 = vmatmul.mubr.bf16.gmra.mxu0 %v746
        %v785 = vpop.f32.mrf.mxu0
        %v786 = vadd.f32 %v731, %v785
        %v787 = vpop.f32.mrf.mxu0
        %v788 = vpop.f32.mrf.mxu0
        %v789 = vadd.f32 %v731, %v788
        %v790 = vpop.f32.mrf.mxu0
        %791 = vmatprep.mubr.bf16.mxu0 0
        %792 = vmatmul.mubr.bf16.gmra.mxu0 %v749
        %v793 = vpop.f32.mrf.mxu0
        %v794 = vadd.f32 %v731, %v793
        %v795 = vpop.f32.mrf.mxu0
        %v796 = vpop.f32.mrf.mxu0
        %v797 = vadd.f32 %v731, %v796
        %v798 = vpop.f32.mrf.mxu0
        %799 = vdwg.mxu0
        %v800 = vmax.f32 %v786, 0.0
        %v801 = vmax.f32 %v789, 0.0
        %v802 = vmax.f32 %v794, 0.0
        %v803 = vmax.f32 %v797, 0.0
        %v804 = vpack.c.bf16 %v801, %v800
        %v805 = vpack.c.bf16 %v803, %v802
        %v806 = vld [vmem:[%s9] sm:$0xf]
        %v807 = vld [vmem:[%s9 + $0x4] sm:$0xf]
        %v808 = vld [vmem:[%s9 + $0x8] sm:$0xf]
        %v809 = vld [vmem:[%s9 + $0xc] sm:$0xf]
        %v810 = vld [vmem:[%s9 + $0x10] sm:$0xf]
        %v811 = vld [vmem:[%s9 + $0x14] sm:$0xf]
        %v812 = vld [vmem:[%s9 + $0x18] sm:$0xf]
        %v813 = vld [vmem:[%s9 + $0x1c] sm:$0xf]
        %v814 = vld [vmem:[%s10] sm:$0x1]
        %v816 = vlaneseq
        %v817 = vshrl.u32 %v816, 7
        %v818 = vsub.s32 0, %v817
        %v819 = vrot.slane %v814, %v818
        %v829 = vunpack.c.l.b16 %v806
        %v830 = vunpack.c.l.b16 %v807
        %v831 = vunpack.c.l.b16 %v808
        %v832 = vunpack.c.l.b16 %v809
        %v833 = vunpack.c.l.b16 %v810
        %v834 = vunpack.c.l.b16 %v811
        %v835 = vunpack.c.l.b16 %v812
        %v836 = vunpack.c.l.b16 %v813
        %v837 = vpack.c.b16 %v830, %v829
        %v838 = vpack.c.b16 %v832, %v831
        %v839 = vpack.c.b16 %v834, %v833
        %v840 = vpack.c.b16 %v836, %v835
        %v846 = vsel %vm575, %v804, 0
        %v849 = vsel %vm575, %v805, 0
        %851 = vmatprep.subr.bf16.mxu0 0
        %852 = vmatpush1.bf16.msra.mxu0 0
        %853 = vmatprep.subr.bf16.mxu0 0
        %854 = vmatpush1.bf16.msra.mxu0 0
        %855 = vmatprep.subr.bf16.mxu0 0
        %856 = vmatpush1.bf16.msra.mxu0 0
        %857 = vmatprep.subr.bf16.mxu0 0
        %858 = vmatpush1.bf16.msra.mxu0 0
        %859 = vmatprep.subr.bf16.mxu0 0
        %860 = vmatpush1.bf16.msra.mxu0 %v840
        %861 = vmatprep.subr.bf16.mxu0 0
        %862 = vmatpush1.bf16.msra.mxu0 %v839
        %863 = vmatprep.subr.bf16.mxu0 0
        %864 = vmatpush1.bf16.msra.mxu0 %v838
        %865 = vmatprep.subr.bf16.mxu0 0
        %866 = vmatpush1.bf16.msra.mxu0 %v837
        %867 = vmatprep.subr.bf16.mxu0 0
        %868 = vmatpush2.bf16.msra.mxu0 0
        %869 = vmatprep.subr.bf16.mxu0 0
        %870 = vmatpush2.bf16.msra.mxu0 0
        %871 = vmatprep.subr.bf16.mxu0 0
        %872 = vmatpush2.bf16.msra.mxu0 0
        %873 = vmatprep.subr.bf16.mxu0 0
        %874 = vmatpush2.bf16.msra.mxu0 0
        %875 = vmatprep.subr.bf16.mxu0 0
        %876 = vmatpush2.bf16.msra.mxu0 0
        %877 = vmatprep.subr.bf16.mxu0 0
        %878 = vmatpush2.bf16.msra.mxu0 0
        %879 = vmatprep.subr.bf16.mxu0 0
        %880 = vmatpush2.bf16.msra.mxu0 0
        %881 = vmatprep.subr.bf16.mxu0 0
        %882 = vmatpush2.bf16.msra.mxu0 0
        %883 = vmatprep.mubr.bf16.mxu0 0
        %884 = vmatmul.mubr.bf16.gmra.mxu0 %v846
        %v885 = vpop.f32.mrf.mxu0
        %v886 = vadd.f32 %v819, %v885
        %v887 = vpop.f32.mrf.mxu0
        %v888 = vpop.f32.mrf.mxu0
        %v889 = vadd.f32 %v819, %v888
        %v890 = vpop.f32.mrf.mxu0
        %891 = vmatprep.mubr.bf16.mxu0 0
        %892 = vmatmul.mubr.bf16.gmra.mxu0 %v849
        %v893 = vpop.f32.mrf.mxu0
        %v894 = vadd.f32 %v819, %v893
        %v895 = vpop.f32.mrf.mxu0
        %v896 = vpop.f32.mrf.mxu0
        %v897 = vadd.f32 %v819, %v896
        %v898 = vpop.f32.mrf.mxu0
        %899 = vdwg.mxu0
        %900 = vst [vmem:[%s395] sm:$0xff] %v886
        %901 = vst [vmem:[%s395 + $0x8] sm:$0xff] %v889
        %902 = vst [vmem:[%s395 + $0x10] sm:$0xff] %v894
        %903 = vst [vmem:[%s395 + $0x18] sm:$0xff] %v897
        %s904 = sand.u32 %s270, 1
        %s905 = scalar_lea.sflag [#allocation4], %s904
        %s906 = sand.u32 %s270, 1
        %s907 = smul.addr %s906, 32
        %s908 = scalar_lea.vmem [#allocation5], %s907
        // Predicated region
        $region69: #{tpu_custom_call.1} parent=63 // pred_check
          %p909 = pneg %p280
        $region70: #{tpu_custom_call.1} parent=63 // pred_check_branch
          %911 = sbr.rel (%p909) target = $region72
        $region71: #{tpu_custom_call.1} parent=63 // pred_region
          %s912 = smul.u32 4, %s26
          %s914 = ssub.s32 512, 512
          %915 = vsyncadd %s905, %s914
          %s916 = smul.addr %s912, 128
          %s917 = scalar_lea.hbm %s11, %s916
          %s918 = sshll.u32 %s908, 4
          %s919 = int_to_ptr.vmem [resolvable:$true] %s918
          %924 = dma.vmem_to_hbm [thread:$0]  %s919, 512, %s917, %s905, 128, 128, 8
        $region72: #{tpu_custom_call.1} parent=63 // pred_fallthru
          _
      $region64: #{tpu_custom_call.1} parent=5 // pred_fallthru
        _
      %p925 = scmp.le.s32.totalorder 2, %s21
      // Predicated region
      $region73: #{tpu_custom_call.1} parent=5 // pred_check
        %p926 = pneg %p925
      $region74: #{tpu_custom_call.1} parent=5 // pred_check_branch
        %928 = sbr.rel (%p926) target = $region76
      $region75: #{tpu_custom_call.1} parent=5 // pred_region
        %s929 = ssub.s32 %s21, 2
        // Predicated region
        $region77: #{tpu_custom_call.1} parent=75 // pred_check
          %p930 = pneg %p286
        $region78: #{tpu_custom_call.1} parent=75 // pred_check_branch
          %932 = sbr.rel (%p930) target = $region80
        $region79: #{tpu_custom_call.1} parent=75 // pred_region
          %s933 = sand.u32 %s271, 1
          %s934 = scalar_lea.sflag [#allocation4], %s933
          %s935 = sand.u32 %s271, 1
          %s936 = smul.addr %s935, 32
          %s937 = scalar_lea.vmem [#allocation5], %s936
          %938 = dma.done %s934, 512
        $region80: #{tpu_custom_call.1} parent=75 // pred_fallthru
          _
      $region76: #{tpu_custom_call.1} parent=5 // pred_fallthru
        _
    $region6: #{tpu_custom_call.1} parent=1 // loop_footer
      %s25 = sadd.s32 1, %s21
    $region7: #{tpu_custom_call.1} parent=1 // loop_footer_branch
      %20 = sbr.rel target = $region3
    $region8: #{tpu_custom_call.1} parent=1 // loop_exit
      _
    %939 = vsyncpa [#allocation3], 1
    %s940 = scalar_lea.sflag [#allocation3], 1
    %941 = vsyncpa %s940, 1
    %942 = vsyncpa [#allocation4], 1
    %s943 = scalar_lea.sflag [#allocation4], 1
    %944 = vsyncpa %s943, 1

</llo_original>
